<compile_context>
chip_gen: v6e
topology: v6e:2x2x1
jax: 0.10.0
libtpu: 0.0.40
codegen_flags: <defaults>
</compile_context>

<pallas_src>
import functools

import jax
import jax.numpy as jnp
from jax import lax
from jax.experimental import pallas as pl
from jax.experimental.pallas import tpu as pltpu


# ---------------------------------------------------------------- shared per-head math
def _head_nll_sum(y_ref, tgt_col, valid=None):
    """Sum over rows of per-sample NLL = logsumexp(logits) - logits[target]."""
    logits = y_ref[...].astype(jnp.float32)                     # in-kernel upcast
    m = jnp.max(logits, axis=-1, keepdims=True)                  # (rows, 1)
    shifted = logits - m
    lse = jnp.log(jnp.sum(jnp.exp(shifted), axis=-1, keepdims=True))
    cls = lax.broadcasted_iota(jnp.int32, logits.shape, 1)        # (rows, C)
    picked = jnp.sum(jnp.where(cls == tgt_col, shifted, 0.0),
                     axis=-1, keepdims=True)                      # (rows, 1)
    nll = lse - picked
    if valid is not None:
        nll = jnp.where(valid, nll, 0.0)                          # mask padded rows
    return jnp.sum(nll)                                           # scalar


# ---------------------------------------------------------------- grid-free fast path
def _wce_small_kernel(t_ref, y1_ref, y2_ref, y3_ref, w_ref, out_ref):
    # t: (B,3) i32 VMEM; y*: (B,C) VMEM native dtype; w: (3,) f32 SMEM;
    # out: (1,1) f32 SMEM.
    b = y1_ref.shape[0]
    inv_b = 1.0 / b
    t = t_ref[...]
    total = (w_ref[0] * _head_nll_sum(y1_ref, t[:, 0:1])
             + w_ref[1] * _head_nll_sum(y2_ref, t[:, 1:2])
             + w_ref[2] * _head_nll_sum(y3_ref, t[:, 2:3]))
    out_ref[0, 0] = total * (inv_b * inv_b)        # CE mean /B and module's extra /B


# ---------------------------------------------------------------- batch-tiled path
def _wce_tiled_kernel(t_ref, y1_ref, y2_ref, y3_ref, w_ref, out_ref, *, batch):
    # t: (TB,3) i32; y*: (TB,C) native dtype; w: (3,) f32 SMEM; out: (1,8,128) f32.
    tb = y1_ref.shape[0]
    row = pl.program_id(0) * tb + lax.broadcasted_iota(jnp.int32, (tb, 1), 0)
    valid = row < batch                                           # mask partial tile
    t = t_ref[...]
    partial = (w_ref[0] * _head_nll_sum(y1_ref, t[:, 0:1], valid)
               + w_ref[1] * _head_nll_sum(y2_ref, t[:, 1:2], valid)
               + w_ref[2] * _head_nll_sum(y3_ref, t[:, 2:3], valid))
    # Lane-dense (8,128) store per grid step; only [0,0] is consumed outside.
    out_ref[...] = jnp.zeros(out_ref.shape, jnp.float32) + partial


# ---------------------------------------------------------------- wrapper
def weighted_cross_entropy(output, target, loss_weights, *,
                           small_threshold=1 << 18, max_tb=1024,
                           vmem_budget_bytes=12 << 20):
    """output: (y1, y2, y3) each (B, C) logits (any float dtype);
    target: (B, 3) integer class indices; loss_weights: (3,) floats."""
    y1, y2, y3 = output
    B, C = y1.shape
    targets = target.astype(jnp.int32)                            # (B,3), no transpose
    weights = jnp.asarray(loss_weights, jnp.float32).reshape(3)

    smem = pl.BlockSpec(memory_space=pltpu.MemorySpace.SMEM)
    vmem = pl.BlockSpec(memory_space=pltpu.MemorySpace.VMEM)

    if B < 8 or 3 * B * C <= small_threshold:
        # Fast path: one grid-free invocation (fixed per-step overhead dominates
        # at the module's real classification-head sizes).
        out = pl.pallas_call(
            _wce_small_kernel,
            out_shape=jax.ShapeDtypeStruct((1, 1), jnp.float32),
            in_specs=[vmem, vmem, vmem, vmem, smem],
            out_specs=smem,
        )(targets, y1, y2, y3, weights)
        return out[0, 0]

    # Tiled path: TB rows per grid step, sized so double-buffered inputs plus
    # f32 temporaries stay under the smallest scoped-VMEM default (v5e 16 MiB;
    # comfortably within v7x's 64 MiB physical VMEM).
    itemsize = max(jnp.dtype(y.dtype).itemsize for y in (y1, y2, y3))
    per_row = 2 * 3 * C * itemsize + 2 * 128 * 4 + 6 * C * 4
    tb = min(max_tb, max(8, vmem_budget_bytes // per_row))
    tb = max(8, (tb // 8) * 8)
    tb = min(tb, max(8, (B // 8) * 8))          # never exceed the array extent
    nt = pl.cdiv(B, tb)

    partials = pl.pallas_call(
        functools.partial(_wce_tiled_kernel, batch=B),
        out_shape=jax.ShapeDtypeStruct((nt, 8, 128), jnp.float32),
        grid=(nt,),
        in_specs=[pl.BlockSpec((tb, 3), lambda i: (i, 0)),
                  pl.BlockSpec((tb, C), lambda i: (i, 0)),
                  pl.BlockSpec((tb, C), lambda i: (i, 0)),
                  pl.BlockSpec((tb, C), lambda i: (i, 0)),
                  smem],
        out_specs=pl.BlockSpec((1, 8, 128), lambda i: (i, 0, 0)),
        compiler_params=pltpu.CompilerParams(
            dimension_semantics=("parallel",)),     # v7x: split batch over 2 TCs
    )(targets, y1, y2, y3, weights)
    inv_b = 1.0 / B
    return jnp.sum(partials[:, 0, 0]) * (inv_b * inv_b)


# ---------------------------------------------------------------- pure-JAX reference
def weighted_ce_ref(output, target, loss_weights):
    B = target.shape[0]
    total = jnp.float32(0.0)
    for i, y in enumerate(output):
        logp = jax.nn.log_softmax(y.astype(jnp.float32), axis=-1)
        nll = -jnp.take_along_axis(logp, target[:, i:i + 1].astype(jnp.int32),
                                   axis=-1)[:, 0]
        total = total + loss_weights[i] * jnp.mean(nll)
    return total / B


# ---------------------------------------------------------------- main
if __name__ == "__main__":
    key = jax.random.PRNGKey(0)
    k1, k2, k3, kt, k4, k5, k6, kt2 = jax.random.split(key, 8)

    loss_weights = jnp.array([0.5, 0.3, 0.2], jnp.float32)

    # ---- small / grid-free fast path (module-realistic sizes) ----
    B, C = 2, 16
    y1 = jax.random.normal(k1, (B, C), jnp.float32)
    y2 = jax.random.normal(k2, (B, C), jnp.float32)
    y3 = jax.random.normal(k3, (B, C), jnp.float32)
    tgt = jax.random.randint(kt, (B, 3), 0, C, dtype=jnp.int32)

    small_fn = jax.jit(weighted_cross_entropy)
    loss_small = small_fn((y1, y2, y3), tgt, loss_weights)
    jax.block_until_ready(loss_small)
    ref_small = weighted_ce_ref((y1, y2, y3), tgt, loss_weights)
    rel = abs(float(loss_small) - float(ref_small)) / max(abs(float(ref_small)), 1e-30)
    assert rel < 1e-4, f"small-path rel err {rel}"

    # ---- batch-tiled path (bf16 heads, B not a multiple of the tile) ----
    B2, C2 = 516, 32
    z1 = jax.random.normal(k4, (B2, C2), jnp.float32).astype(jnp.bfloat16)
    z2 = jax.random.normal(k5, (B2, C2), jnp.float32).astype(jnp.bfloat16)
    z3 = jax.random.normal(k6, (B2, C2), jnp.float32).astype(jnp.bfloat16)
    tgt2 = jax.random.randint(kt2, (B2, 3), 0, C2, dtype=jnp.int32)

    tiled_fn = jax.jit(functools.partial(weighted_cross_entropy, small_threshold=0))
    loss_tiled = tiled_fn((z1, z2, z3), tgt2, loss_weights)
    jax.block_until_ready(loss_tiled)
    ref_tiled = weighted_ce_ref((z1, z2, z3), tgt2, loss_weights)
    rel2 = abs(float(loss_tiled) - float(ref_tiled)) / max(abs(float(ref_tiled)), 1e-30)
    assert rel2 < 1e-4, f"tiled-path rel err {rel2}"

    print("KERNEL_OK")
</pallas_src>

<mosaic_0001>
module attributes {stable_mosaic.version = 11 : i64} {
  func.func @_wce_small_kernel(%arg0: memref<2x3xi32, #tpu.memory_space<vmem>>, %arg1: memref<2x16xf32, #tpu.memory_space<vmem>>, %arg2: memref<2x16xf32, #tpu.memory_space<vmem>>, %arg3: memref<2x16xf32, #tpu.memory_space<vmem>>, %arg4: memref<3xf32, #tpu.memory_space<smem>>, %arg5: memref<1x1xf32, #tpu.memory_space<smem>>) attributes {dimension_semantics = [], scalar_prefetch = 0 : i64, scratch_operands = 0 : i64, tpu.core_type = #tpu.core_type<tc>} {
    %c0 = arith.constant 0 : index
    %c0_0 = arith.constant 0 : index
    %0 = vector.load %arg0[%c0, %c0_0] : memref<2x3xi32, #tpu.memory_space<vmem>>, vector<2x3xi32>
    %c0_1 = arith.constant 0 : index
    %1 = memref.load %arg4[%c0_1] : memref<3xf32, #tpu.memory_space<smem>>
    %2 = vector.extract_strided_slice %0 {offsets = [0, 0], sizes = [2, 1], strides = [1, 1]} : vector<2x3xi32> to vector<2x1xi32>
    %c0_2 = arith.constant 0 : index
    %c0_3 = arith.constant 0 : index
    %3 = vector.load %arg1[%c0_2, %c0_3] : memref<2x16xf32, #tpu.memory_space<vmem>>, vector<2x16xf32>
    %cst = arith.constant dense<0xFF800000> : vector<2xf32>
    %4 = vector.multi_reduction <maximumf>, %3, %cst [1] : vector<2x16xf32> to vector<2xf32>
    %5 = vector.shape_cast %4 : vector<2xf32> to vector<2x1xf32>
    %6 = vector.broadcast %5 : vector<2x1xf32> to vector<2x16xf32>
    %7 = arith.subf %3, %6 : vector<2x16xf32>
    %8 = math.exp %7 : vector<2x16xf32>
    %cst_4 = arith.constant dense<0.000000e+00> : vector<2xf32>
    %9 = vector.multi_reduction <add>, %8, %cst_4 [1] : vector<2x16xf32> to vector<2xf32>
    %10 = vector.shape_cast %9 : vector<2xf32> to vector<2x1xf32>
    %11 = math.log %10 : vector<2x1xf32>
    %12 = tpu.iota {dimensions = array<i32: 1>} : vector<2x16xi32>
    %13 = vector.broadcast %2 : vector<2x1xi32> to vector<2x16xi32>
    %14 = arith.cmpi eq, %12, %13 : vector<2x16xi32>
    %cst_5 = arith.constant 0.000000e+00 : f32
    %15 = vector.broadcast %cst_5 : f32 to vector<2x16xf32>
    %16 = arith.select %14, %7, %15 : vector<2x16xi1>, vector<2x16xf32>
    %cst_6 = arith.constant dense<0.000000e+00> : vector<2xf32>
    %17 = vector.multi_reduction <add>, %16, %cst_6 [1] : vector<2x16xf32> to vector<2xf32>
    %18 = vector.shape_cast %17 : vector<2xf32> to vector<2x1xf32>
    %19 = arith.subf %11, %18 : vector<2x1xf32>
    %20 = vector.shape_cast %19 : vector<2x1xf32> to vector<1x2x1xf32>
    %cst_7 = arith.constant dense<0.000000e+00> : vector<1xf32>
    %21 = vector.multi_reduction <add>, %20, %cst_7 [1, 2] : vector<1x2x1xf32> to vector<1xf32>
    %22 = vector.shape_cast %21 : vector<1xf32> to vector<1x1x1xf32>
    %23 = vector.extract %22[0, 0, 0] : f32 from vector<1x1x1xf32>
    %24 = arith.mulf %1, %23 : f32
    %c1 = arith.constant 1 : index
    %25 = memref.load %arg4[%c1] : memref<3xf32, #tpu.memory_space<smem>>
    %26 = vector.extract_strided_slice %0 {offsets = [0, 1], sizes = [2, 1], strides = [1, 1]} : vector<2x3xi32> to vector<2x1xi32>
    %c0_8 = arith.constant 0 : index
    %c0_9 = arith.constant 0 : index
    %27 = vector.load %arg2[%c0_8, %c0_9] : memref<2x16xf32, #tpu.memory_space<vmem>>, vector<2x16xf32>
    %cst_10 = arith.constant dense<0xFF800000> : vector<2xf32>
    %28 = vector.multi_reduction <maximumf>, %27, %cst_10 [1] : vector<2x16xf32> to vector<2xf32>
    %29 = vector.shape_cast %28 : vector<2xf32> to vector<2x1xf32>
    %30 = vector.broadcast %29 : vector<2x1xf32> to vector<2x16xf32>
    %31 = arith.subf %27, %30 : vector<2x16xf32>
    %32 = math.exp %31 : vector<2x16xf32>
    %cst_11 = arith.constant dense<0.000000e+00> : vector<2xf32>
    %33 = vector.multi_reduction <add>, %32, %cst_11 [1] : vector<2x16xf32> to vector<2xf32>
    %34 = vector.shape_cast %33 : vector<2xf32> to vector<2x1xf32>
    %35 = math.log %34 : vector<2x1xf32>
    %36 = tpu.iota {dimensions = array<i32: 1>} : vector<2x16xi32>
    %37 = vector.broadcast %26 : vector<2x1xi32> to vector<2x16xi32>
    %38 = arith.cmpi eq, %36, %37 : vector<2x16xi32>
    %cst_12 = arith.constant 0.000000e+00 : f32
    %39 = vector.broadcast %cst_12 : f32 to vector<2x16xf32>
    %40 = arith.select %38, %31, %39 : vector<2x16xi1>, vector<2x16xf32>
    %cst_13 = arith.constant dense<0.000000e+00> : vector<2xf32>
    %41 = vector.multi_reduction <add>, %40, %cst_13 [1] : vector<2x16xf32> to vector<2xf32>
    %42 = vector.shape_cast %41 : vector<2xf32> to vector<2x1xf32>
    %43 = arith.subf %35, %42 : vector<2x1xf32>
    %44 = vector.shape_cast %43 : vector<2x1xf32> to vector<1x2x1xf32>
    %cst_14 = arith.constant dense<0.000000e+00> : vector<1xf32>
    %45 = vector.multi_reduction <add>, %44, %cst_14 [1, 2] : vector<1x2x1xf32> to vector<1xf32>
    %46 = vector.shape_cast %45 : vector<1xf32> to vector<1x1x1xf32>
    %47 = vector.extract %46[0, 0, 0] : f32 from vector<1x1x1xf32>
    %48 = arith.mulf %25, %47 : f32
    %49 = arith.addf %24, %48 : f32
    %c2 = arith.constant 2 : index
    %50 = memref.load %arg4[%c2] : memref<3xf32, #tpu.memory_space<smem>>
    %51 = vector.extract_strided_slice %0 {offsets = [0, 2], sizes = [2, 1], strides = [1, 1]} : vector<2x3xi32> to vector<2x1xi32>
    %c0_15 = arith.constant 0 : index
    %c0_16 = arith.constant 0 : index
    %52 = vector.load %arg3[%c0_15, %c0_16] : memref<2x16xf32, #tpu.memory_space<vmem>>, vector<2x16xf32>
    %cst_17 = arith.constant dense<0xFF800000> : vector<2xf32>
    %53 = vector.multi_reduction <maximumf>, %52, %cst_17 [1] : vector<2x16xf32> to vector<2xf32>
    %54 = vector.shape_cast %53 : vector<2xf32> to vector<2x1xf32>
    %55 = vector.broadcast %54 : vector<2x1xf32> to vector<2x16xf32>
    %56 = arith.subf %52, %55 : vector<2x16xf32>
    %57 = math.exp %56 : vector<2x16xf32>
    %cst_18 = arith.constant dense<0.000000e+00> : vector<2xf32>
    %58 = vector.multi_reduction <add>, %57, %cst_18 [1] : vector<2x16xf32> to vector<2xf32>
    %59 = vector.shape_cast %58 : vector<2xf32> to vector<2x1xf32>
    %60 = math.log %59 : vector<2x1xf32>
    %61 = tpu.iota {dimensions = array<i32: 1>} : vector<2x16xi32>
    %62 = vector.broadcast %51 : vector<2x1xi32> to vector<2x16xi32>
    %63 = arith.cmpi eq, %61, %62 : vector<2x16xi32>
    %cst_19 = arith.constant 0.000000e+00 : f32
    %64 = vector.broadcast %cst_19 : f32 to vector<2x16xf32>
    %65 = arith.select %63, %56, %64 : vector<2x16xi1>, vector<2x16xf32>
    %cst_20 = arith.constant dense<0.000000e+00> : vector<2xf32>
    %66 = vector.multi_reduction <add>, %65, %cst_20 [1] : vector<2x16xf32> to vector<2xf32>
    %67 = vector.shape_cast %66 : vector<2xf32> to vector<2x1xf32>
    %68 = arith.subf %60, %67 : vector<2x1xf32>
    %69 = vector.shape_cast %68 : vector<2x1xf32> to vector<1x2x1xf32>
    %cst_21 = arith.constant dense<0.000000e+00> : vector<1xf32>
    %70 = vector.multi_reduction <add>, %69, %cst_21 [1, 2] : vector<1x2x1xf32> to vector<1xf32>
    %71 = vector.shape_cast %70 : vector<1xf32> to vector<1x1x1xf32>
    %72 = vector.extract %71[0, 0, 0] : f32 from vector<1x1x1xf32>
    %73 = arith.mulf %50, %72 : f32
    %74 = arith.addf %49, %73 : f32
    %cst_22 = arith.constant 2.500000e-01 : f32
    %75 = arith.mulf %74, %cst_22 : f32
    %c0_23 = arith.constant 0 : index
    %c0_24 = arith.constant 0 : index
    %76 = memref.load %arg5[%c0_23, %c0_24] : memref<1x1xf32, #tpu.memory_space<smem>>
    memref.store %75, %arg5[%c0_23, %c0_24] : memref<1x1xf32, #tpu.memory_space<smem>>
    return
  }
}

</mosaic_0001>

<llo_original>
// kernel: weighted_cross_entropy.1
$region0: #{weighted_cross_entropy.1}
  #allocation0 [shape = 'u32[]', space=smem, size = 0x4, offset = 0x4, fixed_abs, tag = 'smem constant byte address 0x4 - core index']
  #allocation1 [shape = 'u32[144,128]{1,0:T(1,128)}', space=vmem, size = 0x12000, scoped, tag = 'internal scratch']
  %s0 = inlined_call_operand.vmem [shape: s32[2,3], index: 0, kind: input, shape index: {}]
  %s1 = inlined_call_operand.hbm [shape: f32[2,16], index: 1, kind: input, shape index: {}]
  %s2 = inlined_call_operand.hbm [shape: f32[2,16], index: 2, kind: input, shape index: {}]
  %s3 = inlined_call_operand.hbm [shape: f32[2,16], index: 3, kind: input, shape index: {}]
  %s4 = inlined_call_operand.vmem [shape: f32[3], index: 4, kind: input, shape index: {}]
  %s5 = inlined_call_operand.hbm [shape: f32[1,1], index: 5, kind: output, shape index: {}]
  %s6 = sld [smem:[#allocation0]]
  $region46: #{weighted_cross_entropy.1} parent=0
    _
  %s8 = ssub.s32 1, %s6
  %s9 = scalar_select 0, %s8, %s6
  $region1: #{weighted_cross_entropy.1} parent=0
    #allocation2 [shape = 'u8[1024]{0}', space=vmem, size = 0x400, scoped, tag = 'input window, operand 1, single buffered']
    #allocation3 [shape = 's32[1]{0}', space=sflag, size = 0x4, scoped, tag = 'scoped memory for weighted_cross_entropy.1']
    #allocation4 [shape = 's32[1]{0}', space=sflag, size = 0x4, scoped, tag = 'scoped memory for weighted_cross_entropy.1']
    #allocation5 [shape = 's32[1]{0}', space=sflag, size = 0x4, scoped, tag = 'scoped memory for weighted_cross_entropy.1']
    #allocation6 [shape = 'u8[1024]{0}', space=vmem, size = 0x400, scoped, tag = 'input window, operand 2, single buffered']
    #allocation7 [shape = 's32[1]{0}', space=sflag, size = 0x4, scoped, tag = 'scoped memory for weighted_cross_entropy.1']
    #allocation8 [shape = 'u8[1024]{0}', space=vmem, size = 0x400, scoped, tag = 'input window, operand 3, single buffered']
    #allocation9 [shape = 'u8[512]{0}', space=smem, size = 0x200, scoped, tag = 'input window, operand 4, single buffered']
    #allocation10 [shape = 'u8[512]{0}', space=smem, size = 0x200, scoped, tag = 'output window, operand 0, single buffered']
    %10 = vsyncpa [#allocation3], 0
    %11 = vsyncpa [#allocation7], 0
    %12 = vsyncpa [#allocation5], 0
    %13 = vsyncpa [#allocation4], 0
    // Predicated region
    $region2: #{weighted_cross_entropy.1} parent=1 // pred_check
      _
    $region3: #{weighted_cross_entropy.1} parent=1 // pred_check_branch
      %15 = sbr.rel (0) target = $region5
    $region4: #{weighted_cross_entropy.1} parent=1 // pred_region
      _
    $region5: #{weighted_cross_entropy.1} parent=1 // pred_fallthru
      _
    // Predicated region
    $region6: #{weighted_cross_entropy.1} parent=1 // pred_check
      _
    $region7: #{weighted_cross_entropy.1} parent=1 // pred_check_branch
      %17 = sbr.rel (0) target = $region9
    $region8: #{weighted_cross_entropy.1} parent=1 // pred_region
      %s19 = ssub.s32 32, 32
      %20 = vsyncadd [#allocation3], %s19
      %s22 = sshll.u32 [#allocation2], 4
      %s23 = int_to_ptr.vmem [resolvable:$true] %s22
      %25 = dma.hbm_to_vmem [thread:$0]  %s1, 32, %s23, [#allocation3]
    $region9: #{weighted_cross_entropy.1} parent=1 // pred_fallthru
      _
    // Predicated region
    $region10: #{weighted_cross_entropy.1} parent=1 // pred_check
      _
    $region11: #{weighted_cross_entropy.1} parent=1 // pred_check_branch
      %27 = sbr.rel (0) target = $region13
    $region12: #{weighted_cross_entropy.1} parent=1 // pred_region
      %s29 = ssub.s32 32, 32
      %30 = vsyncadd [#allocation7], %s29
      %s32 = sshll.u32 [#allocation6], 4
      %s33 = int_to_ptr.vmem [resolvable:$true] %s32
      %35 = dma.hbm_to_vmem [thread:$0]  %s2, 32, %s33, [#allocation7]
    $region13: #{weighted_cross_entropy.1} parent=1 // pred_fallthru
      _
    // Predicated region
    $region14: #{weighted_cross_entropy.1} parent=1 // pred_check
      _
    $region15: #{weighted_cross_entropy.1} parent=1 // pred_check_branch
      %37 = sbr.rel (0) target = $region17
    $region16: #{weighted_cross_entropy.1} parent=1 // pred_region
      %s39 = ssub.s32 32, 32
      %40 = vsyncadd [#allocation7], %s39
      %s42 = sshll.u32 [#allocation8], 4
      %s43 = int_to_ptr.vmem [resolvable:$true] %s42
      %45 = dma.hbm_to_vmem [thread:$0]  %s3, 32, %s43, [#allocation7]
    $region17: #{weighted_cross_entropy.1} parent=1 // pred_fallthru
      _
    // Predicated region
    $region18: #{weighted_cross_entropy.1} parent=1 // pred_check
      _
    $region19: #{weighted_cross_entropy.1} parent=1 // pred_check_branch
      %47 = sbr.rel (0) target = $region21
    $region20: #{weighted_cross_entropy.1} parent=1 // pred_region
      %s49 = ssub.s32 16, 16
      %50 = vsyncadd [#allocation5], %s49
      %s52 = sshll.u32 %s4, 4
      %s53 = int_to_ptr.vmem [resolvable:$true] %s52
      %55 = dma.vmem_to_smem %s53, 16, [#allocation9], [#allocation5]
    $region21: #{weighted_cross_entropy.1} parent=1 // pred_fallthru
      _
    // Predicated region
    $region22: #{weighted_cross_entropy.1} parent=1 // pred_check
      _
    $region23: #{weighted_cross_entropy.1} parent=1 // pred_check_branch
      %57 = sbr.rel (0) target = $region25
    $region24: #{weighted_cross_entropy.1} parent=1 // pred_region
      %58 = dma.done [#allocation3], 32
    $region25: #{weighted_cross_entropy.1} parent=1 // pred_fallthru
      _
    // Predicated region
    $region26: #{weighted_cross_entropy.1} parent=1 // pred_check
      _
    $region27: #{weighted_cross_entropy.1} parent=1 // pred_check_branch
      %60 = sbr.rel (0) target = $region29
    $region28: #{weighted_cross_entropy.1} parent=1 // pred_region
      %61 = dma.done [#allocation7], 32
    $region29: #{weighted_cross_entropy.1} parent=1 // pred_fallthru
      _
    // Predicated region
    $region30: #{weighted_cross_entropy.1} parent=1 // pred_check
      _
    $region31: #{weighted_cross_entropy.1} parent=1 // pred_check_branch
      %63 = sbr.rel (0) target = $region33
    $region32: #{weighted_cross_entropy.1} parent=1 // pred_region
      %64 = dma.done [#allocation7], 32
    $region33: #{weighted_cross_entropy.1} parent=1 // pred_fallthru
      _
    // Predicated region
    $region34: #{weighted_cross_entropy.1} parent=1 // pred_check
      _
    $region35: #{weighted_cross_entropy.1} parent=1 // pred_check_branch
      %66 = sbr.rel (0) target = $region37
    $region36: #{weighted_cross_entropy.1} parent=1 // pred_region
      %67 = dma.done [#allocation5], 16
    $region37: #{weighted_cross_entropy.1} parent=1 // pred_fallthru
      _
    %68 = sfence
    %v69 = vld [vmem:[%s0] sm:$0x3]
    %s70 = sld [smem:[#allocation9]]
    %v71 = vld [vmem:[#allocation2] sm:$0x3]
    %vm72 = vcmask 123904
    %v73 = vsel %vm72, %v71, -inf
    %74 = vmax.xlane.f32.xlu0 %v73
    %v75 = vpop.xlane.xlu0 %74
    %v76 = vsub.f32 %v71, %v75
    %v77 = vmul.f32 %v76, 1.442695
    %v78 = vpow.pop %v77
    %v79 = vsel %vm72, %v78, 0.0
    %80 = vadd.xlane.f32.xlu0 %v79
    %v81 = vpop.xlane.xlu0 %80
    %v82 = vlog2.pop %v81
    %v83 = vmul.f32 %v82, 0.6931472
    %v84 = vlaneseq
    %v85 = vand.u32 %v84, 127
    %86 = vset.pattern.permute.xlu0 0
    %87 = vperm.xlu0 %86, %v69
    %v88 = vpop.permute.xlu0 %87
    %vm89 = vcmp.eq.s32.totalorder %v85, %v88
    %v90 = vsel %vm89, %v76, 0.0
    %v91 = vsel %vm72, %v90, 0.0
    %92 = vadd.xlane.f32.xlu0 %v91
    %v93 = vpop.xlane.xlu0 %92
    %v94 = vsub.f32 %v83, %v93
    %vm95 = vcmask 1024
    %v96 = vsel %vm95, %v94, 0.0
    %97 = vadd.xlane.f32.xlu0 %v96
    %v98 = vpop.xlane.xlu0 %97
    %v99 = vrot.slane %v98, 4
    %v100 = vadd.f32 %v98, %v99
    %v101 = vrot.slane %v100, 2
    %v102 = vadd.f32 %v100, %v101
    %v103 = vrot.slane %v102, 1
    %v104 = vadd.f32 %v102, %v103
    %s105 = vtos %v104
    %s106 = smul.f32 %s70, %s105
    %s107 = sld [smem:[#allocation9 + $0x1]]
    %v108 = vld [vmem:[#allocation6] sm:$0x3]
    %v109 = vsel %vm72, %v108, -inf
    %110 = vmax.xlane.f32.xlu0 %v109
    %v111 = vpop.xlane.xlu0 %110
    %v112 = vsub.f32 %v108, %v111
    %v113 = vmul.f32 %v112, 1.442695
    %v114 = vpow.pop %v113
    %v115 = vsel %vm72, %v114, 0.0
    %116 = vadd.xlane.f32.xlu0 %v115
    %v117 = vpop.xlane.xlu0 %116
    %v118 = vlog2.pop %v117
    %v119 = vmul.f32 %v118, 0.6931472
    %120 = vset.pattern.permute.xlu0 1
    %121 = vperm.xlu0 %120, %v69
    %v122 = vpop.permute.xlu0 %121
    %vm123 = vcmp.eq.s32.totalorder %v85, %v122
    %v124 = vsel %vm123, %v112, 0.0
    %v125 = vsel %vm72, %v124, 0.0
    %126 = vadd.xlane.f32.xlu0 %v125
    %v127 = vpop.xlane.xlu0 %126
    %v128 = vsub.f32 %v119, %v127
    %v129 = vsel %vm95, %v128, 0.0
    %130 = vadd.xlane.f32.xlu0 %v129
    %v131 = vpop.xlane.xlu0 %130
    %v132 = vrot.slane %v131, 4
    %v133 = vadd.f32 %v131, %v132
    %v134 = vrot.slane %v133, 2
    %v135 = vadd.f32 %v133, %v134
    %v136 = vrot.slane %v135, 1
    %v137 = vadd.f32 %v135, %v136
    %s138 = vtos %v137
    %s139 = smul.f32 %s107, %s138
    %s140 = sadd.f32 %s106, %s139
    %s141 = sld [smem:[#allocation9 + $0x2]]
    %v142 = vld [vmem:[#allocation8] sm:$0x3]
    %v143 = vsel %vm72, %v142, -inf
    %144 = vmax.xlane.f32.xlu0 %v143
    %v145 = vpop.xlane.xlu0 %144
    %v146 = vsub.f32 %v142, %v145
    %v147 = vmul.f32 %v146, 1.442695
    %v148 = vpow.pop %v147
    %v149 = vsel %vm72, %v148, 0.0
    %150 = vadd.xlane.f32.xlu0 %v149
    %v151 = vpop.xlane.xlu0 %150
    %v152 = vlog2.pop %v151
    %v153 = vmul.f32 %v152, 0.6931472
    %154 = vset.pattern.permute.xlu0 2
    %155 = vperm.xlu0 %154, %v69
    %v156 = vpop.permute.xlu0 %155
    %vm157 = vcmp.eq.s32.totalorder %v85, %v156
    %v158 = vsel %vm157, %v146, 0.0
    %v159 = vsel %vm72, %v158, 0.0
    %160 = vadd.xlane.f32.xlu0 %v159
    %v161 = vpop.xlane.xlu0 %160
    %v162 = vsub.f32 %v153, %v161
    %v163 = vsel %vm95, %v162, 0.0
    %164 = vadd.xlane.f32.xlu0 %v163
    %v165 = vpop.xlane.xlu0 %164
    %v166 = vrot.slane %v165, 4
    %v167 = vadd.f32 %v165, %v166
    %v168 = vrot.slane %v167, 2
    %v169 = vadd.f32 %v167, %v168
    %v170 = vrot.slane %v169, 1
    %v171 = vadd.f32 %v169, %v170
    %s172 = vtos %v171
    %s173 = smul.f32 %s141, %s172
    %s174 = sadd.f32 %s140, %s173
    %s175 = smul.f32 %s174, 0.25
    %s176 = scalar_lea.smem [#allocation10], 0
    %177 = sst [smem:[%s176]] %s175
    // Predicated region
    $region38: #{weighted_cross_entropy.1} parent=1 // pred_check
      _
    $region39: #{weighted_cross_entropy.1} parent=1 // pred_check_branch
      %179 = sbr.rel (0) target = $region41
    $region40: #{weighted_cross_entropy.1} parent=1 // pred_region
      %s181 = ssub.s32 16, 16
      %182 = vsyncadd [#allocation4], %s181
      %185 = dma.smem_to_hbm [#allocation10], 16, %s5, [#allocation4]
    $region41: #{weighted_cross_entropy.1} parent=1 // pred_fallthru
      _
    // Predicated region
    $region42: #{weighted_cross_entropy.1} parent=1 // pred_check
      _
    $region43: #{weighted_cross_entropy.1} parent=1 // pred_check_branch
      %187 = sbr.rel (0) target = $region45
    $region44: #{weighted_cross_entropy.1} parent=1 // pred_region
      %188 = dma.done [#allocation4], 16
    $region45: #{weighted_cross_entropy.1} parent=1 // pred_fallthru
      _
    %189 = sfence
    %190 = vsyncpa [#allocation3], 1
    %191 = vsyncpa [#allocation7], 1
    %192 = vsyncpa [#allocation4], 1
    %193 = vsyncpa [#allocation5], 1

</llo_original>
